<compile_context>
chip_gen: v5e
topology: v5e:2x2
jax: 0.10.0
libtpu: 0.0.40
codegen_flags: <defaults>
</compile_context>

<pallas_src>
import jax
import jax.numpy as jnp
from jax.experimental import pallas as pl
from jax.experimental.pallas import tpu as pltpu


# ---------------------------------------------------------------------------
# Tiling helpers
# ---------------------------------------------------------------------------
def _sublane(dtype) -> int:
    # 8 for 4-byte dtypes, 16 for 2-byte (bf16), 32 for 1-byte.
    return max(8, 32 // jnp.dtype(dtype).itemsize)


def _vmem_capacity_bytes() -> int:
    """Generation-aware VMEM capacity; conservative fallback if unavailable."""
    try:
        return int(pltpu.get_tpu_info().vmem_capacity_bytes)
    except Exception:
        return 64 << 20  # v7x size; safe (smaller) bound for v5e/v6e too


def _choose_tb(batch: int) -> int:
    """Batch tile.  Prefer >= 2 batch blocks (v7x: shard 'parallel' axis across
    both TensorCores) while keeping TB a multiple of 8 so the (TB, H) and
    (TB, 128) output blocks satisfy the (8, 128) layout rule."""
    if batch >= 16 and batch % 8 == 0:
        cands = [d for d in range(8, batch, 8) if batch % d == 0]
        if cands:
            return max(cands)  # largest proper divisor that is a multiple of 8
    return batch  # full-extent batch block (always layout-legal)


def _choose_tl(seq_len: int, dtype, tb: int, hidden_dim: int,
               vmem_cap: int) -> int:
    """Largest sublane-multiple divisor of seq_len whose double-buffered hidden
    tile fits the VMEM budget.  Purely budget-driven (no alignment to the
    text/image boundary)."""
    sub = _sublane(dtype)
    itemsize = jnp.dtype(dtype).itemsize
    # fixed VMEM: 2 f32 scratch accumulators + double-buffered output blocks
    fixed = 4 * tb * hidden_dim * 4 + 2 * tb * (hidden_dim + 128) * 4
    budget = max(4 << 20, int(0.45 * vmem_cap) - fixed)  # for 2x hidden tile
    max_tl = max(sub, budget // max(1, 2 * tb * hidden_dim * itemsize))
    best = None
    d = sub
    limit = min(seq_len, max_tl)
    while d <= limit:
        if seq_len % d == 0:
            best = d
        d += sub
    return best if best is not None else seq_len


# ---------------------------------------------------------------------------
# Kernel
# ---------------------------------------------------------------------------
def _make_kernel(*, n_l_blocks, tl, seq_len, text_len, image_len):
    boundary = text_len // tl       # index of the tile containing the split
    text_rem = text_len % tl        # 0 => the split is on a tile edge
    inv_seq = 1.0 / float(seq_len)
    inv_txt = 1.0 / float(text_len)
    inv_img = 1.0 / float(image_len)

    def kernel(h_ref, mm_ref, stats_ref, tacc_ref, gacc_ref):
        li = pl.program_id(1)

        @pl.when(li == 0)
        def _init():
            tacc_ref[...] = jnp.zeros_like(tacc_ref)
            gacc_ref[...] = jnp.zeros_like(gacc_ref)

        h = h_ref[...].astype(jnp.float32)          # [TB, TL, H], cast once
        total = jnp.sum(h, axis=1)                  # one pass per element
        gacc_ref[...] += total                      # full-sequence accumulator

        if boundary > 0:
            @pl.when(li < boundary)
            def _full_text_tile():
                tacc_ref[...] += total              # tile entirely in text

        if text_rem:
            # Only the single boundary tile needs a masked partial sum.
            @pl.when(li == boundary)
            def _boundary_tile():
                pos = jax.lax.broadcasted_iota(jnp.int32, (1, tl, 1), 1)
                tacc_ref[...] += jnp.sum(jnp.where(pos < text_rem, h, 0.0),
                                         axis=1)

        @pl.when(li == n_l_blocks - 1)
        def _finalize():
            t_sum = tacc_ref[...]
            g_sum = gacc_ref[...]
            i_sum = g_sum - t_sum                   # image = total - text
            mm = g_sum * inv_seq                    # multimodal_target [TB, H]
            txt = t_sum * inv_txt                   # text_output
            img = i_sum * inv_img                   # image_output
            # Per-batch-element SSEs (reduced to MSE in the wrapper).
            t_sse = jnp.sum((txt - mm) ** 2, axis=1, keepdims=True)  # [TB, 1]
            i_sse = jnp.sum((img - mm) ** 2, axis=1, keepdims=True)
            mm_ref[...] = mm.astype(mm_ref.dtype)
            # One lane-dense 128-wide stats block: lane0=text SSE, lane1=image SSE.
            lane = jax.lax.broadcasted_iota(jnp.int32, stats_ref.shape, 1)
            stats_ref[...] = jnp.where(lane == 0, t_sse,
                                       jnp.where(lane == 1, i_sse, 0.0))

    return kernel


# ---------------------------------------------------------------------------
# Wrapper
# ---------------------------------------------------------------------------
def early_fusion_mmt2_forward(hidden, w, b, *, text_len):
    """hidden: [B, L, H] (f32 or bf16); w: [H, C]; b: [C]."""
    B, L, H = hidden.shape
    Hw, C = w.shape
    assert Hw == H
    assert 0 < text_len < L, "need both text and image tokens"
    image_len = L - text_len

    dtype = hidden.dtype
    sub = _sublane(dtype)
    # Pad L to a sublane multiple so a layout-legal TL always exists; padded
    # zero rows fall in the image region and add 0 to the sums (means use the
    # original lengths).
    L_pad = ((L + sub - 1) // sub) * sub
    if L_pad != L:
        hidden = jnp.pad(hidden, ((0, 0), (0, L_pad - L), (0, 0)))

    vmem_cap = _vmem_capacity_bytes()
    TB = _choose_tb(B)
    TL = _choose_tl(L_pad, dtype, TB, H, vmem_cap)
    nB = B // TB
    nL = L_pad // TL

    kernel = _make_kernel(n_l_blocks=nL, tl=TL, seq_len=L,
                          text_len=text_len, image_len=image_len)

    itemsize = jnp.dtype(dtype).itemsize
    req = (2 * TB * TL * H * itemsize          # double-buffered hidden tile
           + 2 * TB * (H + 128) * 4            # double-buffered output blocks
           + 2 * TB * H * 4)                   # f32 scratch accumulators
    # Actual requirement + margin, capped per generation (not a fixed 40 MiB).
    ceiling = (100 << 20) if vmem_cap >= (100 << 20) else (48 << 20)
    vmem_limit = int(min(max(int(req * 1.25), 16 << 20), ceiling))

    mm, stats = pl.pallas_call(
        kernel,
        out_shape=(
            jax.ShapeDtypeStruct((B, H), jnp.float32),     # mean-pooled hidden
            jax.ShapeDtypeStruct((B, 128), jnp.float32),   # per-batch SSEs
        ),
        grid=(nB, nL),
        in_specs=[
            pl.BlockSpec((TB, TL, H), lambda bi, li: (bi, li, 0)),
        ],
        out_specs=(
            pl.BlockSpec((TB, H), lambda bi, li: (bi, 0)),
            pl.BlockSpec((TB, 128), lambda bi, li: (bi, 0)),
        ),
        scratch_shapes=[
            pltpu.VMEM((TB, H), jnp.float32),   # text partial sums
            pltpu.VMEM((TB, H), jnp.float32),   # full-sequence partial sums
        ],
        compiler_params=pltpu.CompilerParams(
            dimension_semantics=("parallel", "arbitrary"),
            vmem_limit_bytes=vmem_limit,
        ),
    )(hidden)

    # head_mm in the wrapper: a [TB, H] x [H, C] matmul badly underfills the
    # MXU inside the kernel and would keep a double-buffered W resident in
    # VMEM; letting XLA do it at M=B is free and frees VMEM for bigger tiles.
    x_mm = jnp.dot(mm, w.astype(jnp.float32),
                   precision=jax.lax.Precision.HIGHEST) + b.astype(jnp.float32)

    # MSELoss 'mean' reduction = mean over all B*H elements.
    inv_bh = 1.0 / float(B * H)
    text_reg = jnp.sum(stats[:, 0]) * inv_bh
    image_reg = jnp.sum(stats[:, 1]) * inv_bh
    return text_reg, image_reg, x_mm


# ---------------------------------------------------------------------------
# Pure-JAX reference
# ---------------------------------------------------------------------------
def reference_forward(hidden, w, b, *, text_len):
    h = hidden.astype(jnp.float32)
    mm = jnp.mean(h, axis=1)
    txt = jnp.mean(h[:, :text_len, :], axis=1)
    img = jnp.mean(h[:, text_len:, :], axis=1)
    t_reg = jnp.mean((txt - mm) ** 2)
    i_reg = jnp.mean((img - mm) ** 2)
    x_mm = jnp.dot(mm, w.astype(jnp.float32),
                   precision=jax.lax.Precision.HIGHEST) + b.astype(jnp.float32)
    return t_reg, i_reg, x_mm


def _check(name, hidden, w, b, text_len, atol):
    t_k, i_k, x_k = early_fusion_mmt2_forward(hidden, w, b, text_len=text_len)
    jax.block_until_ready((t_k, i_k, x_k))
    t_r, i_r, x_r = reference_forward(hidden, w, b, text_len=text_len)
    assert jnp.allclose(t_k, t_r, atol=atol), (name, "text_reg", t_k, t_r)
    assert jnp.allclose(i_k, i_r, atol=atol), (name, "image_reg", i_k, i_r)
    assert jnp.allclose(x_k, x_r, atol=atol), (name, "x_mm")


if __name__ == "__main__":
    key = jax.random.PRNGKey(0)
    k_h, k_w, k_b, k_h2, k_h3 = jax.random.split(key, 5)

    # Shapes consistent with the module at small scale:
    #   batch=2, seq_len=16 (text_len=8 / image=8), hidden_dim=32, num_classes=8
    B, L, H, C = 2, 16, 32, 8
    hidden = jax.random.normal(k_h, (B, L, H), dtype=jnp.float32)
    w = jax.random.normal(k_w, (H, C), dtype=jnp.float32) * 0.02
    b = jax.random.normal(k_b, (C,), dtype=jnp.float32) * 0.02

    # 1) f32, text/image split on a tile edge.
    _check("f32_edge_split", hidden, w, b, text_len=8, atol=1e-5)

    # 2) f32, split inside a tile -> single masked boundary tile.
    _check("f32_masked_boundary", hidden, w, b, text_len=6, atol=1e-5)

    # 3) bf16 hidden state (halved HBM traffic), f32 accumulation in-kernel.
    L2 = 64
    hidden_bf16 = (jax.random.normal(k_h2, (B, L2, H), dtype=jnp.float32)
                   ).astype(jnp.bfloat16)
    _check("bf16", hidden_bf16, w, b, text_len=37, atol=1e-3)

    # 4) f32, L not a sublane multiple -> wrapper pads the sequence.
    L3 = 22
    hidden_odd = jax.random.normal(k_h3, (B, L3, H), dtype=jnp.float32)
    _check("f32_padded_L", hidden_odd, w, b, text_len=9, atol=1e-5)

    print("KERNEL_OK")
</pallas_src>

<mosaic_0001>
module attributes {stable_mosaic.version = 11 : i64} {
  func.func @kernel(%arg0: i32, %arg1: i32, %arg2: memref<2x16x32xf32, #tpu.memory_space<vmem>>, %arg3: memref<2x32xf32, #tpu.memory_space<vmem>>, %arg4: memref<2x128xf32, #tpu.memory_space<vmem>>, %arg5: memref<2x32xf32, #tpu.memory_space<vmem>>, %arg6: memref<2x32xf32, #tpu.memory_space<vmem>>) attributes {dimension_semantics = [#tpu.dimension_semantics<parallel>, #tpu.dimension_semantics<arbitrary>], iteration_bounds = array<i64: 1, 1>, scalar_prefetch = 0 : i64, scratch_operands = 2 : i64, tpu.core_type = #tpu.core_type<tc>, window_params = [{transform_indices = @transform_0, window_bounds = array<i64: 2, 16, 32>}, {transform_indices = @transform_1, window_bounds = array<i64: 2, 32>}, {transform_indices = @transform_2, window_bounds = array<i64: 2, 128>}]} {
    %c0_i32 = arith.constant 0 : i32
    %0 = arith.cmpi eq, %arg1, %c0_i32 : i32
    %1 = arith.extui %0 : i1 to i32
    %c0_i32_0 = arith.constant 0 : i32
    %2 = arith.cmpi ne, %1, %c0_i32_0 : i32
    scf.if %2 {
      %cst_11 = arith.constant 0.000000e+00 : f32
      %14 = vector.broadcast %cst_11 : f32 to vector<2x32xf32>
      %c0_12 = arith.constant 0 : index
      %c0_13 = arith.constant 0 : index
      %15 = vector.load %arg5[%c0_12, %c0_13] : memref<2x32xf32, #tpu.memory_space<vmem>>, vector<2x32xf32>
      tpu.vector_store %arg5[%c0_12, %c0_13], %14 {strides = array<i32>} : memref<2x32xf32, #tpu.memory_space<vmem>>, vector<2x32xf32>,
      %cst_14 = arith.constant 0.000000e+00 : f32
      %16 = vector.broadcast %cst_14 : f32 to vector<2x32xf32>
      %c0_15 = arith.constant 0 : index
      %c0_16 = arith.constant 0 : index
      %17 = vector.load %arg6[%c0_15, %c0_16] : memref<2x32xf32, #tpu.memory_space<vmem>>, vector<2x32xf32>
      tpu.vector_store %arg6[%c0_15, %c0_16], %16 {strides = array<i32>} : memref<2x32xf32, #tpu.memory_space<vmem>>, vector<2x32xf32>,
    } else {
    }
    %c0 = arith.constant 0 : index
    %c0_1 = arith.constant 0 : index
    %c0_2 = arith.constant 0 : index
    %3 = vector.load %arg2[%c0, %c0_1, %c0_2] : memref<2x16x32xf32, #tpu.memory_space<vmem>>, vector<2x16x32xf32>
    %cst = arith.constant dense<0.000000e+00> : vector<2x32xf32>
    %4 = vector.multi_reduction <add>, %3, %cst [1] : vector<2x16x32xf32> to vector<2x32xf32>
    %c0_3 = arith.constant 0 : index
    %c0_4 = arith.constant 0 : index
    %5 = vector.load %arg6[%c0_3, %c0_4] : memref<2x32xf32, #tpu.memory_space<vmem>>, vector<2x32xf32>
    %6 = arith.addf %5, %4 : vector<2x32xf32>
    %c0_5 = arith.constant 0 : index
    %c0_6 = arith.constant 0 : index
    %7 = vector.load %arg6[%c0_5, %c0_6] : memref<2x32xf32, #tpu.memory_space<vmem>>, vector<2x32xf32>
    tpu.vector_store %arg6[%c0_5, %c0_6], %6 {strides = array<i32>} : memref<2x32xf32, #tpu.memory_space<vmem>>, vector<2x32xf32>,
    %c0_i32_7 = arith.constant 0 : i32
    %8 = arith.cmpi eq, %arg1, %c0_i32_7 : i32
    %9 = arith.extui %8 : i1 to i32
    %c0_i32_8 = arith.constant 0 : i32
    %10 = arith.cmpi ne, %9, %c0_i32_8 : i32
    scf.if %10 {
      %14 = tpu.iota {dimensions = array<i32: 1>} : vector<1x16x1xi32>
      %c0_11 = arith.constant 0 : index
      %c0_12 = arith.constant 0 : index
      %15 = vector.load %arg5[%c0_11, %c0_12] : memref<2x32xf32, #tpu.memory_space<vmem>>, vector<2x32xf32>
      %c8_i32 = arith.constant 8 : i32
      %16 = vector.broadcast %c8_i32 : i32 to vector<1x16x1xi32>
      %17 = arith.cmpi slt, %14, %16 : vector<1x16x1xi32>
      %cst_13 = arith.constant 0.000000e+00 : f32
      %18 = vector.shape_cast %17 : vector<1x16x1xi1> to vector<1x16x1xi1>
      %19 = vector.broadcast %18 : vector<1x16x1xi1> to vector<2x16x32xi1>
      %20 = vector.broadcast %cst_13 : f32 to vector<2x16x32xf32>
      %21 = arith.select %19, %3, %20 : vector<2x16x32xi1>, vector<2x16x32xf32>
      %cst_14 = arith.constant dense<0.000000e+00> : vector<2x32xf32>
      %22 = vector.multi_reduction <add>, %21, %cst_14 [1] : vector<2x16x32xf32> to vector<2x32xf32>
      %23 = arith.addf %15, %22 : vector<2x32xf32>
      %c0_15 = arith.constant 0 : index
      %c0_16 = arith.constant 0 : index
      %24 = vector.load %arg5[%c0_15, %c0_16] : memref<2x32xf32, #tpu.memory_space<vmem>>, vector<2x32xf32>
      tpu.vector_store %arg5[%c0_15, %c0_16], %23 {strides = array<i32>} : memref<2x32xf32, #tpu.memory_space<vmem>>, vector<2x32xf32>,
    } else {
    }
    %c0_i32_9 = arith.constant 0 : i32
    %11 = arith.cmpi eq, %arg1, %c0_i32_9 : i32
    %12 = arith.extui %11 : i1 to i32
    %c0_i32_10 = arith.constant 0 : i32
    %13 = arith.cmpi ne, %12, %c0_i32_10 : i32
    scf.if %13 {
      %c0_11 = arith.constant 0 : index
      %c0_12 = arith.constant 0 : index
      %14 = vector.load %arg5[%c0_11, %c0_12] : memref<2x32xf32, #tpu.memory_space<vmem>>, vector<2x32xf32>
      %c0_13 = arith.constant 0 : index
      %c0_14 = arith.constant 0 : index
      %15 = vector.load %arg6[%c0_13, %c0_14] : memref<2x32xf32, #tpu.memory_space<vmem>>, vector<2x32xf32>
      %16 = arith.subf %15, %14 : vector<2x32xf32>
      %cst_15 = arith.constant 6.250000e-02 : f32
      %17 = vector.broadcast %cst_15 : f32 to vector<2x32xf32>
      %18 = arith.mulf %15, %17 : vector<2x32xf32>
      %cst_16 = arith.constant 1.250000e-01 : f32
      %19 = vector.broadcast %cst_16 : f32 to vector<2x32xf32>
      %20 = arith.mulf %14, %19 : vector<2x32xf32>
      %cst_17 = arith.constant 1.250000e-01 : f32
      %21 = vector.broadcast %cst_17 : f32 to vector<2x32xf32>
      %22 = arith.mulf %16, %21 : vector<2x32xf32>
      %23 = arith.subf %20, %18 : vector<2x32xf32>
      %24 = arith.mulf %23, %23 : vector<2x32xf32>
      %cst_18 = arith.constant dense<0.000000e+00> : vector<2xf32>
      %25 = vector.multi_reduction <add>, %24, %cst_18 [1] : vector<2x32xf32> to vector<2xf32>
      %26 = vector.shape_cast %25 : vector<2xf32> to vector<2x1xf32>
      %27 = arith.subf %22, %18 : vector<2x32xf32>
      %28 = arith.mulf %27, %27 : vector<2x32xf32>
      %cst_19 = arith.constant dense<0.000000e+00> : vector<2xf32>
      %29 = vector.multi_reduction <add>, %28, %cst_19 [1] : vector<2x32xf32> to vector<2xf32>
      %30 = vector.shape_cast %29 : vector<2xf32> to vector<2x1xf32>
      %c0_20 = arith.constant 0 : index
      %c0_21 = arith.constant 0 : index
      %31 = vector.load %arg3[%c0_20, %c0_21] : memref<2x32xf32, #tpu.memory_space<vmem>>, vector<2x32xf32>
      tpu.vector_store %arg3[%c0_20, %c0_21], %18 {strides = array<i32>} : memref<2x32xf32, #tpu.memory_space<vmem>>, vector<2x32xf32>,
      %32 = tpu.iota {dimensions = array<i32: 1>} : vector<2x128xi32>
      %c0_i32_22 = arith.constant 0 : i32
      %33 = vector.broadcast %c0_i32_22 : i32 to vector<2x128xi32>
      %34 = arith.cmpi eq, %32, %33 : vector<2x128xi32>
      %c1_i32 = arith.constant 1 : i32
      %35 = vector.broadcast %c1_i32 : i32 to vector<2x128xi32>
      %36 = arith.cmpi eq, %32, %35 : vector<2x128xi32>
      %cst_23 = arith.constant 0.000000e+00 : f32
      %37 = vector.shape_cast %30 : vector<2x1xf32> to vector<2x1xf32>
      %38 = vector.broadcast %37 : vector<2x1xf32> to vector<2x128xf32>
      %39 = vector.broadcast %cst_23 : f32 to vector<2x128xf32>
      %40 = arith.select %36, %38, %39 : vector<2x128xi1>, vector<2x128xf32>
      %41 = vector.shape_cast %26 : vector<2x1xf32> to vector<2x1xf32>
      %42 = vector.broadcast %41 : vector<2x1xf32> to vector<2x128xf32>
      %43 = arith.select %34, %42, %40 : vector<2x128xi1>, vector<2x128xf32>
      %c0_24 = arith.constant 0 : index
      %c0_25 = arith.constant 0 : index
      %44 = vector.load %arg4[%c0_24, %c0_25] : memref<2x128xf32, #tpu.memory_space<vmem>>, vector<2x128xf32>
      tpu.vector_store %arg4[%c0_24, %c0_25], %43 {strides = array<i32>} : memref<2x128xf32, #tpu.memory_space<vmem>>, vector<2x128xf32>,
    } else {
    }
    return
  }
  func.func @transform_0(%arg0: i32, %arg1: i32) -> (i32, i32, i32) {
    %c0_i32 = arith.constant 0 : i32
    %c0_i32_0 = arith.constant 0 : i32
    return %arg0, %arg1, %c0_i32 : i32, i32, i32
  }
  func.func @transform_1(%arg0: i32, %arg1: i32) -> (i32, i32) {
    %c0_i32 = arith.constant 0 : i32
    %c0_i32_0 = arith.constant 0 : i32
    return %arg0, %c0_i32 : i32, i32
  }
  func.func @transform_2(%arg0: i32, %arg1: i32) -> (i32, i32) {
    %c0_i32 = arith.constant 0 : i32
    %c0_i32_0 = arith.constant 0 : i32
    return %arg0, %c0_i32 : i32, i32
  }
}

</mosaic_0001>

<llo_original>
// kernel: tpu_custom_call.1
$region0: #{tpu_custom_call.1}
  #allocation0 [shape = 'u32[]', space=smem, size = 0x4, offset = 0x4, fixed_abs, tag = 'smem constant byte address 0x4 - core index']
  #allocation1 [shape = 'u32[72,128]{1,0:T(1,128)}', space=vmem, size = 0x9000, scoped, tag = 'internal scratch']
  #allocation2 [shape = 'f32[2,32]{1,0:T(2,128)}', space=vmem, size = 0x400, scoped, tag = 'scratch operand']
  #allocation3 [shape = 'f32[2,32]{1,0:T(2,128)}', space=vmem, size = 0x400, scoped, tag = 'scratch operand']
  %s0 = inlined_call_operand.hbm [shape: f32[2,16,32], index: 0, kind: input, shape index: {}]
  %s1 = inlined_call_operand.hbm [shape: f32[2,32], index: 1, kind: output, shape index: {0}]
  %s2 = inlined_call_operand.hbm [shape: f32[2,128], index: 2, kind: output, shape index: {1}]
  %3 = xla_tuple %s1, %s2
  %s4 = sld [smem:[#allocation0]]
  $region34: #{tpu_custom_call.1} parent=0
    _
  %s6 = ssub.s32 1, %s4
  %s7 = scalar_select 0, %s6, %s4
  $region1: #{tpu_custom_call.1} parent=0
    #allocation4 [shape = 'u8[16384]{0}', space=vmem, size = 0x4000, scoped, tag = 'input window, operand 0, single buffered']
    #allocation5 [shape = 's32[1]{0}', space=sflag, size = 0x4, scoped, tag = 'scoped memory for tpu_custom_call.1']
    #allocation6 [shape = 's32[1]{0}', space=sflag, size = 0x4, scoped, tag = 'scoped memory for tpu_custom_call.1']
    #allocation7 [shape = 'u8[1024]{0}', space=vmem, size = 0x400, scoped, tag = 'output window, operand 0, single buffered']
    #allocation8 [shape = 'u8[1024]{0}', space=vmem, size = 0x400, scoped, tag = 'output window, operand 1, single buffered']
    #allocation9 [shape = 's32[1]{0}', space=sflag, size = 0x4, scoped, tag = 'scoped memory for tpu_custom_call.1']
    %8 = vsyncpa [#allocation5], 0
    %9 = vsyncpa [#allocation6], 0
    %10 = vsyncpa [#allocation9], 0
    // Predicated region
    $region2: #{tpu_custom_call.1} parent=1 // pred_check
      _
    $region3: #{tpu_custom_call.1} parent=1 // pred_check_branch
      %12 = sbr.rel (0) target = $region5
    $region4: #{tpu_custom_call.1} parent=1 // pred_region
      %14 = vsyncadd [#allocation5], 0
      %s15 = sshll.u32 %s0, 4
      %s16 = int_to_ptr.hbm [resolvable:$true] %s15
      %s17 = sshll.u32 [#allocation4], 4
      %s18 = int_to_ptr.vmem [resolvable:$true] %s17
      %23 = dma.hbm_to_vmem [thread:$0]  %s16, 512, %s18, [#allocation5], 128, 128, 8
    $region5: #{tpu_custom_call.1} parent=1 // pred_fallthru
      _
    // Predicated region
    $region6: #{tpu_custom_call.1} parent=1 // pred_check
      _
    $region7: #{tpu_custom_call.1} parent=1 // pred_check_branch
      %25 = sbr.rel (0) target = $region9
    $region8: #{tpu_custom_call.1} parent=1 // pred_region
      %27 = dma.done [#allocation5], 512
    $region9: #{tpu_custom_call.1} parent=1 // pred_fallthru
      _
    %p28 = scmp.eq.s32.totalorder 0, 0
    // Predicated region
    $region10: #{tpu_custom_call.1} parent=1 // pred_check
      %p29 = pneg %p28
    $region11: #{tpu_custom_call.1} parent=1 // pred_check_branch
      %31 = sbr.rel (%p29) target = $region13
    $region12: #{tpu_custom_call.1} parent=1 // pred_region
      %vm32 = vcmask 254976
      %33 = vst.msk [vmem:[#allocation2] sm:$0x3] %vm32, 0.0
      %34 = vst.msk [vmem:[#allocation3] sm:$0x3] %vm32, 0.0
    $region13: #{tpu_custom_call.1} parent=1 // pred_fallthru
      _
    %v35 = vld [vmem:[#allocation4] sm:$0xff]
    %v36 = vld [vmem:[#allocation4 + $0x8] sm:$0xff]
    %v37 = vld [vmem:[#allocation4 + $0x10] sm:$0xff]
    %v38 = vld [vmem:[#allocation4 + $0x18] sm:$0xff]
    %vm39 = vcmask 261120
    %v40 = vsel %vm39, %v35, 0.0
    %v41 = vsel %vm39, %v36, 0.0
    %v42 = vadd.f32 %v40, %v41
    %v43 = vrot.slane %v42, 4
    %v44 = vadd.f32 %v42, %v43
    %v45 = vrot.slane %v44, 2
    %v46 = vadd.f32 %v44, %v45
    %v47 = vrot.slane %v46, 1
    %v48 = vadd.f32 %v46, %v47
    %v49 = vsel %vm39, %v37, 0.0
    %v50 = vsel %vm39, %v38, 0.0
    %v51 = vadd.f32 %v49, %v50
    %v52 = vrot.slane %v51, 4
    %v53 = vadd.f32 %v51, %v52
    %v54 = vrot.slane %v53, 2
    %v55 = vadd.f32 %v53, %v54
    %v56 = vrot.slane %v55, 1
    %v57 = vadd.f32 %v55, %v56
    %v58 = vld [vmem:[#allocation3] sm:$0x3]
    %vm61 = vcmask 1041409
    %v62 = vsel %vm61, %v57, %v48
    %v64 = vadd.f32 %v58, %v62
    %vm65 = vcmask 254976
    %66 = vst.msk [vmem:[#allocation3] sm:$0x3] %vm65, %v64
    // Predicated region
    $region14: #{tpu_custom_call.1} parent=1 // pred_check
      %p67 = pneg %p28
    $region15: #{tpu_custom_call.1} parent=1 // pred_check_branch
      %69 = sbr.rel (%p67) target = $region17
    $region16: #{tpu_custom_call.1} parent=1 // pred_region
      %v70 = vlaneseq
      %v71 = vshrl.u32 %v70, 7
      %v72 = vadd.s32 %v71, 8
      %v73 = vld [vmem:[#allocation2] sm:$0x3]
      %vm74 = vcmp.lt.s32.totalorder %v71, 8
      %vm75 = vcmp.lt.s32.totalorder %v72, 8
      %v76 = vsel %vm74, 1, 0
      %v77 = vsel %vm75, 1, 0
      %vm78 = vcmp.eq.s32.totalorder %v76, 1
      %vm79 = vcmp.eq.s32.totalorder %v77, 1
      %v80 = vsel %vm78, %v35, 0.0
      %v81 = vsel %vm79, %v36, 0.0
      %v82 = vsel %vm78, %v37, 0.0
      %v83 = vsel %vm79, %v38, 0.0
      %v84 = vsel %vm39, %v80, 0.0
      %v85 = vsel %vm39, %v81, 0.0
      %v86 = vadd.f32 %v84, %v85
      %v87 = vrot.slane %v86, 4
      %v88 = vadd.f32 %v86, %v87
      %v89 = vrot.slane %v88, 2
      %v90 = vadd.f32 %v88, %v89
      %v91 = vrot.slane %v90, 1
      %v92 = vadd.f32 %v90, %v91
      %v93 = vsel %vm39, %v82, 0.0
      %v94 = vsel %vm39, %v83, 0.0
      %v95 = vadd.f32 %v93, %v94
      %v96 = vrot.slane %v95, 4
      %v97 = vadd.f32 %v95, %v96
      %v98 = vrot.slane %v97, 2
      %v99 = vadd.f32 %v97, %v98
      %v100 = vrot.slane %v99, 1
      %v101 = vadd.f32 %v99, %v100
      %v104 = vsel %vm61, %v101, %v92
      %v106 = vadd.f32 %v73, %v104
      %107 = vst.msk [vmem:[#allocation2] sm:$0x3] %vm65, %v106
      %v108 = vld [vmem:[#allocation2] sm:$0x3]
      %v109 = vld [vmem:[#allocation3] sm:$0x3]
      %v110 = vsub.f32 %v109, %v108
      %v111 = vmul.f32 %v109, 0.0625
      %v112 = vmul.f32 %v108, 0.125
      %v113 = vmul.f32 %v110, 0.125
      %v114 = vsub.f32 %v112, %v111
      %v115 = vmul.f32 %v114, %v114
      %v116 = vsel %vm65, %v115, 0.0
      %117 = vadd.xlane.f32.xlu0 %v116
      %v118 = vpop.xlane.xlu0 %117
      %v119 = vsub.f32 %v113, %v111
      %v120 = vmul.f32 %v119, %v119
      %v121 = vsel %vm65, %v120, 0.0
      %122 = vadd.xlane.f32.xlu0 %v121
      %v123 = vpop.xlane.xlu0 %122
      %124 = vst.msk [vmem:[#allocation7] sm:$0x3] %vm65, %v111
      %v125 = vlaneseq
      %v126 = vand.u32 %v125, 127
      %vm127 = vcmp.eq.s32.totalorder %v126, 0
      %vm128 = vcmp.eq.s32.totalorder %v126, 1
      %v129 = vsel %vm128, %v123, 0.0
      %v130 = vsel %vm127, %v118, %v129
      %131 = vst [vmem:[#allocation8] sm:$0x3] %v130
    $region17: #{tpu_custom_call.1} parent=1 // pred_fallthru
      _
    // Predicated region
    $region18: #{tpu_custom_call.1} parent=1 // pred_check
      _
    $region19: #{tpu_custom_call.1} parent=1 // pred_check_branch
      %133 = sbr.rel (0) target = $region21
    $region20: #{tpu_custom_call.1} parent=1 // pred_region
      %135 = vsyncadd [#allocation6], 0
      %s137 = sshll.u32 [#allocation7], 4
      %s138 = int_to_ptr.vmem [resolvable:$true] %s137
      %s139 = sshll.u32 %s1, 4
      %s140 = int_to_ptr.hbm [resolvable:$true] %s139
      %142 = dma.vmem_to_hbm [thread:$0]  %s138, 32, %s140, [#allocation6]
    $region21: #{tpu_custom_call.1} parent=1 // pred_fallthru
      _
    // Predicated region
    $region22: #{tpu_custom_call.1} parent=1 // pred_check
      _
    $region23: #{tpu_custom_call.1} parent=1 // pred_check_branch
      %144 = sbr.rel (0) target = $region25
    $region24: #{tpu_custom_call.1} parent=1 // pred_region
      %146 = vsyncadd [#allocation9], 0
      %s148 = sshll.u32 [#allocation8], 4
      %s149 = int_to_ptr.vmem [resolvable:$true] %s148
      %s150 = sshll.u32 %s2, 4
      %s151 = int_to_ptr.hbm [resolvable:$true] %s150
      %153 = dma.vmem_to_hbm [thread:$0]  %s149, 32, %s151, [#allocation9]
    $region25: #{tpu_custom_call.1} parent=1 // pred_fallthru
      _
    // Predicated region
    $region26: #{tpu_custom_call.1} parent=1 // pred_check
      _
    $region27: #{tpu_custom_call.1} parent=1 // pred_check_branch
      %155 = sbr.rel (0) target = $region29
    $region28: #{tpu_custom_call.1} parent=1 // pred_region
      %157 = dma.done [#allocation6], 32
    $region29: #{tpu_custom_call.1} parent=1 // pred_fallthru
      _
    // Predicated region
    $region30: #{tpu_custom_call.1} parent=1 // pred_check
      _
    $region31: #{tpu_custom_call.1} parent=1 // pred_check_branch
      %159 = sbr.rel (0) target = $region33
    $region32: #{tpu_custom_call.1} parent=1 // pred_region
      %161 = dma.done [#allocation9], 32
    $region33: #{tpu_custom_call.1} parent=1 // pred_fallthru
      _
    %162 = vsyncpa [#allocation5], 1
    %163 = vsyncpa [#allocation6], 1
    %164 = vsyncpa [#allocation9], 1

</llo_original>
